<compile_context>
chip_gen: v6e
topology: v6e:2x2x1
jax: 0.10.0
libtpu: 0.0.40
codegen_flags: <defaults>
</compile_context>

<pallas_src>
import functools

import jax
import jax.numpy as jnp
from jax.experimental import pallas as pl
from jax.experimental.pallas import tpu as pltpu

NEG_SLOPE = 0.01  # PyTorch nn.LeakyReLU default
_LANE = 128


def _leaky_relu(x):
    return jnp.where(x > 0, x, NEG_SLOPE * x)


def _round_up(n, m):
    return ((n + m - 1) // m) * m


def _footscan_mlp_kernel(x_ref, w1_ref, b1_ref, w2_ref, b2_ref, w3_ref, b3_ref,
                         o_ref):
    """Whole 3-layer MLP for one row-tile of (batch*4 feet) samples."""
    x = x_ref[...]                                      # (rt, F) compute dtype
    h = jnp.dot(x, w1_ref[...], preferred_element_type=jnp.float32) + b1_ref[...]
    h = _leaky_relu(h).astype(w2_ref.dtype)             # back to bf16 for the MXU
    h = jnp.dot(h, w2_ref[...], preferred_element_type=jnp.float32) + b2_ref[...]
    h = _leaky_relu(h).astype(w3_ref.dtype)
    o = jnp.dot(h, w3_ref[...], preferred_element_type=jnp.float32) + b3_ref[...]
    o_ref[...] = o.astype(o_ref.dtype)


@functools.partial(
    jax.jit, static_argnames=("latent_size", "row_tile", "compute_dtype"))
def foot_scan_encoder(x, params, *, latent_size=24, row_tile=512,
                      compute_dtype=jnp.bfloat16):
    """x: (B, input_dim). Returns (B, latent_size*4) float32."""
    w1, b1, w2, b2, w3, b3 = params
    B, input_dim = x.shape
    F = input_dim // 4
    assert row_tile % 8 == 0, "row_tile must be a multiple of 8 (sublanes)"

    # (B, 4*F) -> (B*4, F): contiguous view, free. Cast to the compute dtype.
    xr = x.reshape(B * 4, F).astype(compute_dtype)
    R = xr.shape[0]

    # Zero-pad hidden dims to full 128-lane width (exact: pads are zero and
    # LeakyReLU(0) == 0) and cast weights to the compute dtype. Biases stay
    # f32 (added to the f32 MXU accumulator). Weight tensors are < 100 KB, so
    # this one-time plumbing is negligible.
    H1, H2 = w1.shape[1], w2.shape[1]
    H1p, H2p = _round_up(H1, _LANE), _round_up(H2, _LANE)
    w1p = jnp.pad(w1, ((0, 0), (0, H1p - H1))).astype(compute_dtype)
    b1p = jnp.pad(b1, ((0, 0), (0, H1p - H1))).astype(jnp.float32)
    w2p = jnp.pad(w2, ((0, H1p - H1), (0, H2p - H2))).astype(compute_dtype)
    b2p = jnp.pad(b2, ((0, 0), (0, H2p - H2))).astype(jnp.float32)
    w3p = jnp.pad(w3, ((0, H2p - H2), (0, 0))).astype(compute_dtype)
    b3p = b3.astype(jnp.float32)

    # Row tile: big enough to amortize the ~0.35 us per-grid-step overhead, but
    # shrunk so the grid has >= 2 steps when possible (v7x: 2 TensorCores share
    # the "parallel" axis). No host-side pad: Pallas handles the ragged last
    # block (OOB reads are garbage in rows whose writes are masked anyway).
    rt = min(row_tile, _round_up(max(R // 2, 8), 8))
    grid = (pl.cdiv(R, rt),)

    in_itemsize = jnp.dtype(compute_dtype).itemsize
    flops = 2 * R * (F * H1p + H1p * H2p + H2p * latent_size)
    bytes_accessed = (R * F * in_itemsize + R * latent_size * 4 +
                      (F * H1p + H1p * H2p + H2p * latent_size) * in_itemsize +
                      (H1p + H2p + latent_size) * 4)

    out = pl.pallas_call(
        _footscan_mlp_kernel,
        out_shape=jax.ShapeDtypeStruct((R, latent_size), jnp.float32),
        grid_spec=pltpu.PrefetchScalarGridSpec(
            num_scalar_prefetch=0,
            grid=grid,
            in_specs=[
                # activations: tile over rows, full feature width (lane-dense)
                pl.BlockSpec((rt, F), lambda i: (i, 0)),
                # weights / biases: full arrays, resident across the grid
                pl.BlockSpec(w1p.shape, lambda i: (0, 0)),
                pl.BlockSpec(b1p.shape, lambda i: (0, 0)),
                pl.BlockSpec(w2p.shape, lambda i: (0, 0)),
                pl.BlockSpec(b2p.shape, lambda i: (0, 0)),
                pl.BlockSpec(w3p.shape, lambda i: (0, 0)),
                pl.BlockSpec(b3p.shape, lambda i: (0, 0)),
            ],
            out_specs=pl.BlockSpec((rt, latent_size), lambda i: (i, 0)),
        ),
        compiler_params=pltpu.CompilerParams(
            dimension_semantics=("parallel",),
            vmem_limit_bytes=32 * 1024 * 1024),
        cost_estimate=pl.CostEstimate(flops=flops, transcendentals=0,
                                      bytes_accessed=bytes_accessed),
    )(xr, w1p, b1p, w2p, b2p, w3p, b3p)

    # (R, latent) row-major IS the (B, latent*4) layout -> free reshape.
    return out.reshape(B, latent_size * 4)


def init_params(key, size_per_foot, encoder_shape=(80, 64), latent_size=24,
                init_scale=1.0 / jnp.sqrt(2.0)):
    """Synthetic init mirroring the MLP layer shapes (weights (in,out), bias (1,out))."""
    dims = (size_per_foot,) + tuple(encoder_shape) + (latent_size,)
    keys = jax.random.split(key, len(dims) - 1)
    params = []
    for k, din, dout in zip(keys, dims[:-1], dims[1:]):
        w = init_scale * jax.random.normal(k, (din, dout), jnp.float32) / jnp.sqrt(din)
        b = jnp.zeros((1, dout), jnp.float32)
        params += [w, b]
    return tuple(params)


def _reference(x, params, latent_size=24, compute_dtype=jnp.bfloat16):
    """Pure-JAX reference mirroring the kernel's dtype handling."""
    w1, b1, w2, b2, w3, b3 = params
    B, input_dim = x.shape
    xr = x.reshape(-1, input_dim // 4).astype(compute_dtype)

    def lin(h, w, b):
        return jnp.dot(h, w.astype(compute_dtype),
                       preferred_element_type=jnp.float32) + b.astype(jnp.float32)

    h = _leaky_relu(lin(xr, w1, b1)).astype(compute_dtype)
    h = _leaky_relu(lin(h, w2, b2)).astype(compute_dtype)
    o = lin(h, w3, b3)
    return o.reshape(B, latent_size * 4).astype(jnp.float32)


if __name__ == "__main__":
    key = jax.random.PRNGKey(0)
    k_x, k_p, k_x2 = jax.random.split(key, 3)

    B = 2
    size_per_foot = 32
    input_dim = 4 * size_per_foot
    latent_size = 24

    x = jax.random.normal(k_x, (B, input_dim), jnp.float32)
    params = init_params(k_p, size_per_foot, encoder_shape=(80, 64),
                         latent_size=latent_size)

    out = jax.block_until_ready(foot_scan_encoder(x, params, latent_size=latent_size))
    ref = _reference(x, params, latent_size=latent_size)
    assert out.shape == (B, latent_size * 4), out.shape
    assert jnp.allclose(out, ref, atol=1e-2, rtol=1e-2), "mismatch vs reference"

    # Exercise the no-pad / ragged-last-block path (R = 33*4 = 132 rows, grid of 2).
    B2 = 33
    x2 = jax.random.normal(k_x2, (B2, input_dim), jnp.float32)
    out2 = jax.block_until_ready(foot_scan_encoder(x2, params, latent_size=latent_size))
    ref2 = _reference(x2, params, latent_size=latent_size)
    assert out2.shape == (B2, latent_size * 4), out2.shape
    assert jnp.allclose(out2, ref2, atol=1e-2, rtol=1e-2), "mismatch (ragged grid)"

    print("KERNEL_OK")
</pallas_src>

<mosaic_0001>
module attributes {stable_mosaic.version = 11 : i64} {
  func.func @_footscan_mlp_kernel(%arg0: i32, %arg1: memref<8x32xbf16, #tpu.memory_space<vmem>>, %arg2: memref<32x128xbf16, #tpu.memory_space<vmem>>, %arg3: memref<1x128xf32, #tpu.memory_space<vmem>>, %arg4: memref<128x128xbf16, #tpu.memory_space<vmem>>, %arg5: memref<1x128xf32, #tpu.memory_space<vmem>>, %arg6: memref<128x24xbf16, #tpu.memory_space<vmem>>, %arg7: memref<1x24xf32, #tpu.memory_space<vmem>>, %arg8: memref<8x24xf32, #tpu.memory_space<vmem>>) attributes {dimension_semantics = [#tpu.dimension_semantics<parallel>], iteration_bounds = array<i64: 1>, scalar_prefetch = 0 : i64, scratch_operands = 0 : i64, tpu.core_type = #tpu.core_type<tc>, window_params = [{transform_indices = @transform_0, window_bounds = array<i64: 8, 32>}, {pipeline_mode = #tpu.pipeline_mode<synchronous>, transform_indices = @transform_1, window_bounds = array<i64: 32, 128>}, {pipeline_mode = #tpu.pipeline_mode<synchronous>, transform_indices = @transform_2, window_bounds = array<i64: 1, 128>}, {pipeline_mode = #tpu.pipeline_mode<synchronous>, transform_indices = @transform_3, window_bounds = array<i64: 128, 128>}, {pipeline_mode = #tpu.pipeline_mode<synchronous>, transform_indices = @transform_4, window_bounds = array<i64: 1, 128>}, {pipeline_mode = #tpu.pipeline_mode<synchronous>, transform_indices = @transform_5, window_bounds = array<i64: 128, 24>}, {pipeline_mode = #tpu.pipeline_mode<synchronous>, transform_indices = @transform_6, window_bounds = array<i64: 1, 24>}, {transform_indices = @transform_7, window_bounds = array<i64: 8, 24>}]} {
    %c0 = arith.constant 0 : index
    %c0_0 = arith.constant 0 : index
    %0 = vector.load %arg1[%c0, %c0_0] : memref<8x32xbf16, #tpu.memory_space<vmem>>, vector<8x32xbf16>
    %c0_1 = arith.constant 0 : index
    %c0_2 = arith.constant 0 : index
    %1 = vector.load %arg2[%c0_1, %c0_2] : memref<32x128xbf16, #tpu.memory_space<vmem>>, vector<32x128xbf16>
    %cst = arith.constant dense<0.000000e+00> : vector<8x128xf32>
    %2 = tpu.matmul %0, %1, %cst {dimension_numbers = #tpu.dot_dimension_numbers<[1], [0], [0], [1], [0, 0, 1, 1], [], []>} : vector<8x32xbf16>, vector<32x128xbf16>, vector<8x128xf32> -> vector<8x128xf32>
    %c0_3 = arith.constant 0 : index
    %c0_4 = arith.constant 0 : index
    %3 = vector.load %arg3[%c0_3, %c0_4] : memref<1x128xf32, #tpu.memory_space<vmem>>, vector<1x128xf32>
    %4 = vector.broadcast %3 : vector<1x128xf32> to vector<8x128xf32>
    %5 = arith.addf %2, %4 : vector<8x128xf32>
    %cst_5 = arith.constant 0.000000e+00 : f32
    %6 = vector.broadcast %cst_5 : f32 to vector<8x128xf32>
    %7 = arith.cmpf ogt, %5, %6 : vector<8x128xf32>
    %cst_6 = arith.constant 0.00999999977 : f32
    %8 = vector.broadcast %cst_6 : f32 to vector<8x128xf32>
    %9 = arith.mulf %8, %5 : vector<8x128xf32>
    %10 = arith.select %7, %5, %9 : vector<8x128xi1>, vector<8x128xf32>
    %11 = arith.truncf %10 : vector<8x128xf32> to vector<8x128xbf16>
    %c0_7 = arith.constant 0 : index
    %c0_8 = arith.constant 0 : index
    %12 = vector.load %arg4[%c0_7, %c0_8] : memref<128x128xbf16, #tpu.memory_space<vmem>>, vector<128x128xbf16>
    %cst_9 = arith.constant dense<0.000000e+00> : vector<8x128xf32>
    %13 = tpu.matmul %11, %12, %cst_9 {dimension_numbers = #tpu.dot_dimension_numbers<[1], [0], [0], [1], [0, 0, 1, 1], [], []>} : vector<8x128xbf16>, vector<128x128xbf16>, vector<8x128xf32> -> vector<8x128xf32>
    %c0_10 = arith.constant 0 : index
    %c0_11 = arith.constant 0 : index
    %14 = vector.load %arg5[%c0_10, %c0_11] : memref<1x128xf32, #tpu.memory_space<vmem>>, vector<1x128xf32>
    %15 = vector.broadcast %14 : vector<1x128xf32> to vector<8x128xf32>
    %16 = arith.addf %13, %15 : vector<8x128xf32>
    %cst_12 = arith.constant 0.000000e+00 : f32
    %17 = vector.broadcast %cst_12 : f32 to vector<8x128xf32>
    %18 = arith.cmpf ogt, %16, %17 : vector<8x128xf32>
    %cst_13 = arith.constant 0.00999999977 : f32
    %19 = vector.broadcast %cst_13 : f32 to vector<8x128xf32>
    %20 = arith.mulf %19, %16 : vector<8x128xf32>
    %21 = arith.select %18, %16, %20 : vector<8x128xi1>, vector<8x128xf32>
    %22 = arith.truncf %21 : vector<8x128xf32> to vector<8x128xbf16>
    %c0_14 = arith.constant 0 : index
    %c0_15 = arith.constant 0 : index
    %23 = vector.load %arg6[%c0_14, %c0_15] : memref<128x24xbf16, #tpu.memory_space<vmem>>, vector<128x24xbf16>
    %cst_16 = arith.constant dense<0.000000e+00> : vector<8x24xf32>
    %24 = tpu.matmul %22, %23, %cst_16 {dimension_numbers = #tpu.dot_dimension_numbers<[1], [0], [0], [1], [0, 0, 1, 1], [], []>} : vector<8x128xbf16>, vector<128x24xbf16>, vector<8x24xf32> -> vector<8x24xf32>
    %c0_17 = arith.constant 0 : index
    %c0_18 = arith.constant 0 : index
    %25 = vector.load %arg7[%c0_17, %c0_18] : memref<1x24xf32, #tpu.memory_space<vmem>>, vector<1x24xf32>
    %26 = vector.broadcast %25 : vector<1x24xf32> to vector<8x24xf32>
    %27 = arith.addf %24, %26 : vector<8x24xf32>
    %c0_19 = arith.constant 0 : index
    %c0_20 = arith.constant 0 : index
    %28 = vector.load %arg8[%c0_19, %c0_20] : memref<8x24xf32, #tpu.memory_space<vmem>>, vector<8x24xf32>
    tpu.vector_store %arg8[%c0_19, %c0_20], %27 {strides = array<i32>} : memref<8x24xf32, #tpu.memory_space<vmem>>, vector<8x24xf32>,
    return
  }
  func.func @transform_0(%arg0: i32) -> (i32, i32) {
    %c0_i32 = arith.constant 0 : i32
    %c0_i32_0 = arith.constant 0 : i32
    return %arg0, %c0_i32 : i32, i32
  }
  func.func @transform_1(%arg0: i32) -> (i32, i32) {
    %c0_i32 = arith.constant 0 : i32
    %c0_i32_0 = arith.constant 0 : i32
    %c0_i32_1 = arith.constant 0 : i32
    return %c0_i32, %c0_i32_0 : i32, i32
  }
  func.func @transform_2(%arg0: i32) -> (i32, i32) {
    %c0_i32 = arith.constant 0 : i32
    %c0_i32_0 = arith.constant 0 : i32
    %c0_i32_1 = arith.constant 0 : i32
    return %c0_i32, %c0_i32_0 : i32, i32
  }
  func.func @transform_3(%arg0: i32) -> (i32, i32) {
    %c0_i32 = arith.constant 0 : i32
    %c0_i32_0 = arith.constant 0 : i32
    %c0_i32_1 = arith.constant 0 : i32
    return %c0_i32, %c0_i32_0 : i32, i32
  }
  func.func @transform_4(%arg0: i32) -> (i32, i32) {
    %c0_i32 = arith.constant 0 : i32
    %c0_i32_0 = arith.constant 0 : i32
    %c0_i32_1 = arith.constant 0 : i32
    return %c0_i32, %c0_i32_0 : i32, i32
  }
  func.func @transform_5(%arg0: i32) -> (i32, i32) {
    %c0_i32 = arith.constant 0 : i32
    %c0_i32_0 = arith.constant 0 : i32
    %c0_i32_1 = arith.constant 0 : i32
    return %c0_i32, %c0_i32_0 : i32, i32
  }
  func.func @transform_6(%arg0: i32) -> (i32, i32) {
    %c0_i32 = arith.constant 0 : i32
    %c0_i32_0 = arith.constant 0 : i32
    %c0_i32_1 = arith.constant 0 : i32
    return %c0_i32, %c0_i32_0 : i32, i32
  }
  func.func @transform_7(%arg0: i32) -> (i32, i32) {
    %c0_i32 = arith.constant 0 : i32
    %c0_i32_0 = arith.constant 0 : i32
    return %arg0, %c0_i32 : i32, i32
  }
}

</mosaic_0001>

<llo_original>
// kernel: foot_scan_encoder.1
$region0: #{foot_scan_encoder.1}
  #allocation0 [shape = 'u32[]', space=smem, size = 0x4, offset = 0x4, fixed_abs, tag = 'smem constant byte address 0x4 - core index']
  #allocation1 [shape = 'u32[144,128]{1,0:T(1,128)}', space=vmem, size = 0x12000, scoped, tag = 'internal scratch']
  %s0 = inlined_call_operand.vmem [shape: bf16[8,32], index: 0, kind: input, shape index: {}]
  %s1 = inlined_call_operand.vmem [shape: bf16[32,128], index: 1, kind: input, shape index: {}]
  %s2 = inlined_call_operand.vmem [shape: f32[1,128], index: 2, kind: input, shape index: {}]
  %s3 = inlined_call_operand.vmem [shape: bf16[128,128], index: 3, kind: input, shape index: {}]
  %s4 = inlined_call_operand.vmem [shape: f32[1,128], index: 4, kind: input, shape index: {}]
  %s5 = inlined_call_operand.vmem [shape: bf16[128,24], index: 5, kind: input, shape index: {}]
  %s6 = inlined_call_operand.vmem [shape: f32[1,24], index: 6, kind: input, shape index: {}]
  %s7 = inlined_call_operand.vmem [shape: f32[8,24], index: 7, kind: output, shape index: {}]
  %s8 = sld [smem:[#allocation0]]
  $region38: #{foot_scan_encoder.1} parent=0
    _
  %s10 = ssub.s32 1, %s8
  %s11 = scalar_select 0, %s10, %s8
  // Predicated region
  $region2: #{foot_scan_encoder.1} parent=0 // pred_check
    _
  $region3: #{foot_scan_encoder.1} parent=0 // pred_check_branch
    %13 = sbr.rel (0) target = $region5
  $region4: #{foot_scan_encoder.1} parent=0 // pred_region
    _
  $region5: #{foot_scan_encoder.1} parent=0 // pred_fallthru
    _
  // Predicated region
  $region6: #{foot_scan_encoder.1} parent=0 // pred_check
    _
  $region7: #{foot_scan_encoder.1} parent=0 // pred_check_branch
    %15 = sbr.rel (0) target = $region9
  $region8: #{foot_scan_encoder.1} parent=0 // pred_region
    _
  $region9: #{foot_scan_encoder.1} parent=0 // pred_fallthru
    _
  // Predicated region
  $region10: #{foot_scan_encoder.1} parent=0 // pred_check
    _
  $region11: #{foot_scan_encoder.1} parent=0 // pred_check_branch
    %17 = sbr.rel (0) target = $region13
  $region12: #{foot_scan_encoder.1} parent=0 // pred_region
    _
  $region13: #{foot_scan_encoder.1} parent=0 // pred_fallthru
    _
  // Predicated region
  $region14: #{foot_scan_encoder.1} parent=0 // pred_check
    _
  $region15: #{foot_scan_encoder.1} parent=0 // pred_check_branch
    %19 = sbr.rel (0) target = $region17
  $region16: #{foot_scan_encoder.1} parent=0 // pred_region
    _
  $region17: #{foot_scan_encoder.1} parent=0 // pred_fallthru
    _
  // Predicated region
  $region18: #{foot_scan_encoder.1} parent=0 // pred_check
    _
  $region19: #{foot_scan_encoder.1} parent=0 // pred_check_branch
    %21 = sbr.rel (0) target = $region21
  $region20: #{foot_scan_encoder.1} parent=0 // pred_region
    _
  $region21: #{foot_scan_encoder.1} parent=0 // pred_fallthru
    _
  // Predicated region
  $region22: #{foot_scan_encoder.1} parent=0 // pred_check
    _
  $region23: #{foot_scan_encoder.1} parent=0 // pred_check_branch
    %23 = sbr.rel (0) target = $region25
  $region24: #{foot_scan_encoder.1} parent=0 // pred_region
    _
  $region25: #{foot_scan_encoder.1} parent=0 // pred_fallthru
    _
  // Predicated region
  $region26: #{foot_scan_encoder.1} parent=0 // pred_check
    _
  $region27: #{foot_scan_encoder.1} parent=0 // pred_check_branch
    %25 = sbr.rel (0) target = $region29
  $region28: #{foot_scan_encoder.1} parent=0 // pred_region
    _
  $region29: #{foot_scan_encoder.1} parent=0 // pred_fallthru
    _
  %v27 = vld [vmem:[%s0] sm:$0xf]
  %v28 = vld [vmem:[%s1] sm:$0xf]
  %v29 = vld [vmem:[%s1 + $0x4] sm:$0xf]
  %v30 = vld [vmem:[%s1 + $0x8] sm:$0xf]
  %v31 = vld [vmem:[%s1 + $0xc] sm:$0xf]
  %v32 = vld [vmem:[%s2] sm:$0x1]
  %v34 = vlaneseq
  %v35 = vshrl.u32 %v34, 7
  %v36 = vsub.s32 0, %v35
  %v37 = vrot.slane %v32, %v36
  %v43 = vunpack.c.l.b16 %v28
  %v44 = vunpack.c.l.b16 %v29
  %v45 = vunpack.c.l.b16 %v30
  %v46 = vunpack.c.l.b16 %v31
  %v47 = vpack.c.b16 %v44, %v43
  %v48 = vpack.c.b16 %v46, %v45
  %vm51 = vcmask 261120
  %v53 = vsel %vm51, %v27, 0
  %55 = vmatprep.subr.bf16.mxu0 0
  %56 = vmatpush1.bf16.msra.mxu0 0
  %57 = vmatprep.subr.bf16.mxu0 0
  %58 = vmatpush1.bf16.msra.mxu0 0
  %59 = vmatprep.subr.bf16.mxu0 0
  %60 = vmatpush1.bf16.msra.mxu0 0
  %61 = vmatprep.subr.bf16.mxu0 0
  %62 = vmatpush1.bf16.msra.mxu0 0
  %63 = vmatprep.subr.bf16.mxu0 0
  %64 = vmatpush1.bf16.msra.mxu0 0
  %65 = vmatprep.subr.bf16.mxu0 0
  %66 = vmatpush1.bf16.msra.mxu0 0
  %67 = vmatprep.subr.bf16.mxu0 0
  %68 = vmatpush1.bf16.msra.mxu0 %v48
  %69 = vmatprep.subr.bf16.mxu0 0
  %70 = vmatpush1.bf16.msra.mxu0 %v47
  %71 = vmatprep.subr.bf16.mxu0 0
  %72 = vmatpush2.bf16.msra.mxu0 0
  %73 = vmatprep.subr.bf16.mxu0 0
  %74 = vmatpush2.bf16.msra.mxu0 0
  %75 = vmatprep.subr.bf16.mxu0 0
  %76 = vmatpush2.bf16.msra.mxu0 0
  %77 = vmatprep.subr.bf16.mxu0 0
  %78 = vmatpush2.bf16.msra.mxu0 0
  %79 = vmatprep.subr.bf16.mxu0 0
  %80 = vmatpush2.bf16.msra.mxu0 0
  %81 = vmatprep.subr.bf16.mxu0 0
  %82 = vmatpush2.bf16.msra.mxu0 0
  %83 = vmatprep.subr.bf16.mxu0 0
  %84 = vmatpush2.bf16.msra.mxu0 0
  %85 = vmatprep.subr.bf16.mxu0 0
  %86 = vmatpush2.bf16.msra.mxu0 0
  %87 = vmatprep.mubr.bf16.mxu0 0
  %88 = vmatmul.mubr.bf16.gmra.mxu0 %v53
  %v89 = vpop.f32.mrf.mxu0
  %v90 = vadd.f32 %v37, %v89
  %v91 = vpop.f32.mrf.mxu0
  %v92 = vpop.f32.mrf.mxu0
  %v93 = vpop.f32.mrf.mxu0
  %94 = vdwg.mxu0
  %vm95 = vcmp.gt.f32.partialorder %v90, 0.0
  %v96 = vmul.f32 %v90, 0.01
  %v97 = vsel %vm95, %v90, %v96
  %v98 = vpack.c.bf16 %v97, %v97
  %v99 = vld [vmem:[%s3] sm:$0xf]
  %v100 = vld [vmem:[%s3 + $0x4] sm:$0xf]
  %v101 = vld [vmem:[%s3 + $0x8] sm:$0xf]
  %v102 = vld [vmem:[%s3 + $0xc] sm:$0xf]
  %v103 = vld [vmem:[%s3 + $0x10] sm:$0xf]
  %v104 = vld [vmem:[%s3 + $0x14] sm:$0xf]
  %v105 = vld [vmem:[%s3 + $0x18] sm:$0xf]
  %v106 = vld [vmem:[%s3 + $0x1c] sm:$0xf]
  %v107 = vld [vmem:[%s3 + $0x20] sm:$0xf]
  %v108 = vld [vmem:[%s3 + $0x24] sm:$0xf]
  %v109 = vld [vmem:[%s3 + $0x28] sm:$0xf]
  %v110 = vld [vmem:[%s3 + $0x2c] sm:$0xf]
  %v111 = vld [vmem:[%s3 + $0x30] sm:$0xf]
  %v112 = vld [vmem:[%s3 + $0x34] sm:$0xf]
  %v113 = vld [vmem:[%s3 + $0x38] sm:$0xf]
  %v114 = vld [vmem:[%s3 + $0x3c] sm:$0xf]
  %v115 = vld [vmem:[%s4] sm:$0x1]
  %v117 = vlaneseq
  %v118 = vshrl.u32 %v117, 7
  %v119 = vsub.s32 0, %v118
  %v120 = vrot.slane %v115, %v119
  %v138 = vunpack.c.l.b16 %v99
  %v139 = vunpack.c.l.b16 %v100
  %v140 = vunpack.c.l.b16 %v101
  %v141 = vunpack.c.l.b16 %v102
  %v142 = vunpack.c.l.b16 %v103
  %v143 = vunpack.c.l.b16 %v104
  %v144 = vunpack.c.l.b16 %v105
  %v145 = vunpack.c.l.b16 %v106
  %v146 = vunpack.c.l.b16 %v107
  %v147 = vunpack.c.l.b16 %v108
  %v148 = vunpack.c.l.b16 %v109
  %v149 = vunpack.c.l.b16 %v110
  %v150 = vunpack.c.l.b16 %v111
  %v151 = vunpack.c.l.b16 %v112
  %v152 = vunpack.c.l.b16 %v113
  %v153 = vunpack.c.l.b16 %v114
  %v154 = vpack.c.b16 %v139, %v138
  %v155 = vpack.c.b16 %v141, %v140
  %v156 = vpack.c.b16 %v143, %v142
  %v157 = vpack.c.b16 %v145, %v144
  %v158 = vpack.c.b16 %v147, %v146
  %v159 = vpack.c.b16 %v149, %v148
  %v160 = vpack.c.b16 %v151, %v150
  %v161 = vpack.c.b16 %v153, %v152
  %170 = vmatprep.subr.bf16.mxu0 0
  %171 = vmatpush1.bf16.msra.mxu0 %v161
  %172 = vmatprep.subr.bf16.mxu0 0
  %173 = vmatpush1.bf16.msra.mxu0 %v160
  %174 = vmatprep.subr.bf16.mxu0 0
  %175 = vmatpush1.bf16.msra.mxu0 %v159
  %176 = vmatprep.subr.bf16.mxu0 0
  %177 = vmatpush1.bf16.msra.mxu0 %v158
  %178 = vmatprep.subr.bf16.mxu0 0
  %179 = vmatpush1.bf16.msra.mxu0 %v157
  %180 = vmatprep.subr.bf16.mxu0 0
  %181 = vmatpush1.bf16.msra.mxu0 %v156
  %182 = vmatprep.subr.bf16.mxu0 0
  %183 = vmatpush1.bf16.msra.mxu0 %v155
  %184 = vmatprep.subr.bf16.mxu0 0
  %185 = vmatpush1.bf16.msra.mxu0 %v154
  %186 = vmatprep.subr.bf16.mxu0 0
  %187 = vmatpush2.bf16.msra.mxu0 0
  %188 = vmatprep.subr.bf16.mxu0 0
  %189 = vmatpush2.bf16.msra.mxu0 0
  %190 = vmatprep.subr.bf16.mxu0 0
  %191 = vmatpush2.bf16.msra.mxu0 0
  %192 = vmatprep.subr.bf16.mxu0 0
  %193 = vmatpush2.bf16.msra.mxu0 0
  %194 = vmatprep.subr.bf16.mxu0 0
  %195 = vmatpush2.bf16.msra.mxu0 0
  %196 = vmatprep.subr.bf16.mxu0 0
  %197 = vmatpush2.bf16.msra.mxu0 0
  %198 = vmatprep.subr.bf16.mxu0 0
  %199 = vmatpush2.bf16.msra.mxu0 0
  %200 = vmatprep.subr.bf16.mxu0 0
  %201 = vmatpush2.bf16.msra.mxu0 0
  %202 = vmatprep.mubr.bf16.mxu0 0
  %203 = vmatmul.mubr.bf16.gmra.mxu0 %v98
  %v204 = vpop.f32.mrf.mxu0
  %v205 = vadd.f32 %v120, %v204
  %v206 = vpop.f32.mrf.mxu0
  %v207 = vpop.f32.mrf.mxu0
  %v208 = vpop.f32.mrf.mxu0
  %209 = vdwg.mxu0
  %vm210 = vcmp.gt.f32.partialorder %v205, 0.0
  %v211 = vmul.f32 %v205, 0.01
  %v212 = vsel %vm210, %v205, %v211
  %v213 = vpack.c.bf16 %v212, %v212
  %v214 = vld [vmem:[%s5] sm:$0xf]
  %v215 = vld [vmem:[%s5 + $0x4] sm:$0xf]
  %v216 = vld [vmem:[%s5 + $0x8] sm:$0xf]
  %v217 = vld [vmem:[%s5 + $0xc] sm:$0xf]
  %v218 = vld [vmem:[%s5 + $0x10] sm:$0xf]
  %v219 = vld [vmem:[%s5 + $0x14] sm:$0xf]
  %v220 = vld [vmem:[%s5 + $0x18] sm:$0xf]
  %v221 = vld [vmem:[%s5 + $0x1c] sm:$0xf]
  %v222 = vld [vmem:[%s5 + $0x20] sm:$0xf]
  %v223 = vld [vmem:[%s5 + $0x24] sm:$0xf]
  %v224 = vld [vmem:[%s5 + $0x28] sm:$0xf]
  %v225 = vld [vmem:[%s5 + $0x2c] sm:$0xf]
  %v226 = vld [vmem:[%s5 + $0x30] sm:$0xf]
  %v227 = vld [vmem:[%s5 + $0x34] sm:$0xf]
  %v228 = vld [vmem:[%s5 + $0x38] sm:$0xf]
  %v229 = vld [vmem:[%s5 + $0x3c] sm:$0xf]
  %v230 = vld [vmem:[%s6] sm:$0x1]
  %v232 = vlaneseq
  %v233 = vshrl.u32 %v232, 7
  %v234 = vsub.s32 0, %v233
  %v235 = vrot.slane %v230, %v234
  %v253 = vunpack.c.l.b16 %v214
  %v254 = vunpack.c.l.b16 %v215
  %v255 = vunpack.c.l.b16 %v216
  %v256 = vunpack.c.l.b16 %v217
  %v257 = vunpack.c.l.b16 %v218
  %v258 = vunpack.c.l.b16 %v219
  %v259 = vunpack.c.l.b16 %v220
  %v260 = vunpack.c.l.b16 %v221
  %v261 = vunpack.c.l.b16 %v222
  %v262 = vunpack.c.l.b16 %v223
  %v263 = vunpack.c.l.b16 %v224
  %v264 = vunpack.c.l.b16 %v225
  %v265 = vunpack.c.l.b16 %v226
  %v266 = vunpack.c.l.b16 %v227
  %v267 = vunpack.c.l.b16 %v228
  %v268 = vunpack.c.l.b16 %v229
  %v269 = vpack.c.b16 %v254, %v253
  %v270 = vpack.c.b16 %v256, %v255
  %v271 = vpack.c.b16 %v258, %v257
  %v272 = vpack.c.b16 %v260, %v259
  %v273 = vpack.c.b16 %v262, %v261
  %v274 = vpack.c.b16 %v264, %v263
  %v275 = vpack.c.b16 %v266, %v265
  %v276 = vpack.c.b16 %v268, %v267
  %285 = vmatprep.subr.bf16.mxu0 0
  %286 = vmatpush1.bf16.msra.mxu0 %v276
  %287 = vmatprep.subr.bf16.mxu0 0
  %288 = vmatpush1.bf16.msra.mxu0 %v275
  %289 = vmatprep.subr.bf16.mxu0 0
  %290 = vmatpush1.bf16.msra.mxu0 %v274
  %291 = vmatprep.subr.bf16.mxu0 0
  %292 = vmatpush1.bf16.msra.mxu0 %v273
  %293 = vmatprep.subr.bf16.mxu0 0
  %294 = vmatpush1.bf16.msra.mxu0 %v272
  %295 = vmatprep.subr.bf16.mxu0 0
  %296 = vmatpush1.bf16.msra.mxu0 %v271
  %297 = vmatprep.subr.bf16.mxu0 0
  %298 = vmatpush1.bf16.msra.mxu0 %v270
  %299 = vmatprep.subr.bf16.mxu0 0
  %300 = vmatpush1.bf16.msra.mxu0 %v269
  %301 = vmatprep.subr.bf16.mxu0 0
  %302 = vmatpush2.bf16.msra.mxu0 0
  %303 = vmatprep.subr.bf16.mxu0 0
  %304 = vmatpush2.bf16.msra.mxu0 0
  %305 = vmatprep.subr.bf16.mxu0 0
  %306 = vmatpush2.bf16.msra.mxu0 0
  %307 = vmatprep.subr.bf16.mxu0 0
  %308 = vmatpush2.bf16.msra.mxu0 0
  %309 = vmatprep.subr.bf16.mxu0 0
  %310 = vmatpush2.bf16.msra.mxu0 0
  %311 = vmatprep.subr.bf16.mxu0 0
  %312 = vmatpush2.bf16.msra.mxu0 0
  %313 = vmatprep.subr.bf16.mxu0 0
  %314 = vmatpush2.bf16.msra.mxu0 0
  %315 = vmatprep.subr.bf16.mxu0 0
  %316 = vmatpush2.bf16.msra.mxu0 0
  %317 = vmatprep.mubr.bf16.mxu0 0
  %318 = vmatmul.mubr.bf16.gmra.mxu0 %v213
  %v319 = vpop.f32.mrf.mxu0
  %v320 = vadd.f32 %v235, %v319
  %v321 = vpop.f32.mrf.mxu0
  %v322 = vpop.f32.mrf.mxu0
  %v323 = vpop.f32.mrf.mxu0
  %324 = vdwg.mxu0
  %vm325 = vcmask 195584
  %326 = vst.msk [vmem:[%s7] sm:$0xff] %vm325, %v320
  // Predicated region
  $region30: #{foot_scan_encoder.1} parent=0 // pred_check
    _
  $region31: #{foot_scan_encoder.1} parent=0 // pred_check_branch
    %328 = sbr.rel (0) target = $region33
  $region32: #{foot_scan_encoder.1} parent=0 // pred_region
    _
  $region33: #{foot_scan_encoder.1} parent=0 // pred_fallthru
    _
  // Predicated region
  $region34: #{foot_scan_encoder.1} parent=0 // pred_check
    _
  $region35: #{foot_scan_encoder.1} parent=0 // pred_check_branch
    %330 = sbr.rel (0) target = $region37
  $region36: #{foot_scan_encoder.1} parent=0 // pred_region
    _
  $region37: #{foot_scan_encoder.1} parent=0 // pred_fallthru
    _

</llo_original>
